<compile_context>
chip_gen: v7x
topology: tpu7x:2x2x1
jax: 0.10.0
libtpu: 0.0.40
codegen_flags: <defaults>
</compile_context>

<pallas_src>
import jax
import jax.numpy as jnp
from jax.experimental import pallas as pl
from jax.experimental.pallas import tpu as pltpu

H1, H2, N_CLASSES = 36, 24, 3
C_OUT = 8            # narrow padded class dim stored to HBM (3 real + 5 pad)
NEG_BIG = -1e30      # f32-finite logit for padded classes -> exp() == 0


def simple_nn_kernel(x_ref, w1_ref, b1_ref, w2_ref, b2_ref, w3_ref, b3_ref,
                     o_ref):
    """One batch tile: fc1 -> ReLU -> fc2 -> ReLU -> fc3 -> softmax(dim=1)."""
    x = x_ref[...]                                          # [TB, F]   bf16

    # fc1 + ReLU: native bf16 x bf16 MXU, f32 accumulation.
    h1 = jnp.dot(x, w1_ref[...], preferred_element_type=jnp.float32)
    h1 = jnp.maximum(h1 + b1_ref[...], 0.0)                 # [TB, 36]  f32

    # fc2 + ReLU: cast activations to bf16 -> native MXU path (weights stay
    # bf16-resident; no per-step f32 upcast).
    h2 = jnp.dot(h1.astype(jnp.bfloat16), w2_ref[...],
                 preferred_element_type=jnp.float32)
    h2 = jnp.maximum(h2 + b2_ref[...], 0.0)                 # [TB, 24]  f32

    # fc3 -> padded logits. Padded columns have zero weights and a NEG_BIG
    # bias, so exp(logit - m) == 0 there and the softmax is exact over the
    # 3 real classes.
    logits = jnp.dot(h2.astype(jnp.bfloat16), w3_ref[...],
                     preferred_element_type=jnp.float32)
    logits = logits + b3_ref[...]                           # [TB, 8]   f32

    # Numerically stable softmax over dim=1; reciprocal goes to the EUP.
    m = jnp.max(logits, axis=1, keepdims=True)
    e = jnp.exp(logits - m)
    denom = jnp.sum(e, axis=1, keepdims=True)
    o_ref[...] = e * pl.reciprocal(denom, approx=True)      # [TB, 8]   f32


def _round_up(n, m):
    return ((n + m - 1) // m) * m


def _cdiv(a, b):
    return -(-a // b)


def _choose_tile(B, block_b):
    """Pick batch tile tb (multiple of 16) and padded batch b_pad.

    Small batches collapse to a single grid step. Larger batches get an even
    number of tiles (>= 2) so v7x's two TensorCores split the grid evenly.
    """
    tb_single = _round_up(B, 16)
    if tb_single <= block_b:
        return tb_single, tb_single            # grid == 1
    n_tiles = _round_up(_cdiv(B, block_b), 2)  # even, >= 2
    tb = _round_up(_cdiv(B, n_tiles), 16)
    return tb, tb * n_tiles


def simple_nn_forward(x, params, *, block_b=1024):
    """x: [B, input_size] float32 or bfloat16. params: dict (w1,b1,w2,b2,w3,b3).

    Weights are [in, out] (transpose of PyTorch's [out, in]); biases [1, out].
    """
    B, F = x.shape
    tb, b_pad = _choose_tile(B, block_b)

    # Accept caller-provided bf16 x directly; only pad when the batch is ragged.
    x_bf = x if x.dtype == jnp.bfloat16 else x.astype(jnp.bfloat16)
    if b_pad != B:
        x_bf = jnp.zeros((b_pad, F), jnp.bfloat16).at[:B].set(x_bf)

    # bf16 weights (MXU inputs), f32 biases (VPU adds / NEG_BIG stays finite).
    w1 = params["w1"].astype(jnp.bfloat16)
    w2 = params["w2"].astype(jnp.bfloat16)
    b1 = params["b1"]
    b2 = params["b2"]
    # Pad class dim 3 -> 8: zero weight columns, NEG_BIG bias on pad columns.
    w3 = jnp.zeros((H2, C_OUT), jnp.float32).at[:, :N_CLASSES].set(
        params["w3"]).astype(jnp.bfloat16)
    b3 = jnp.full((1, C_OUT), NEG_BIG, jnp.float32).at[:, :N_CLASSES].set(
        params["b3"])

    grid = (b_pad // tb,)

    def resident(arr):  # full-array block, constant index -> stays in VMEM
        return pl.BlockSpec(arr.shape, lambda i: (0, 0))

    out_p = pl.pallas_call(
        simple_nn_kernel,
        out_shape=jax.ShapeDtypeStruct((b_pad, C_OUT), jnp.float32),
        grid=grid,
        in_specs=[
            pl.BlockSpec((tb, F), lambda i: (i, 0)),   # x streamed per tile
            resident(w1), resident(b1),
            resident(w2), resident(b2),
            resident(w3), resident(b3),
        ],
        out_specs=pl.BlockSpec((tb, C_OUT), lambda i: (i, 0)),
        compiler_params=pltpu.CompilerParams(
            dimension_semantics=("parallel",)),        # v7x: shard batch on 2 TCs
    )(x_bf, w1, b1, w2, b2, w3, b3)

    return out_p[:B, :N_CLASSES]


def init_params(key, input_size):
    """Deterministic init mimicking nn.Linear's U(-1/sqrt(fan_in), 1/sqrt(fan_in))."""
    dims = [(input_size, H1), (H1, H2), (H2, N_CLASSES)]
    params = {}
    for idx, (fan_in, fan_out) in enumerate(dims, start=1):
        key, kw, kb = jax.random.split(key, 3)
        bound = 1.0 / jnp.sqrt(jnp.float32(fan_in))
        params[f"w{idx}"] = jax.random.uniform(
            kw, (fan_in, fan_out), jnp.float32, -bound, bound)
        params[f"b{idx}"] = jax.random.uniform(
            kb, (1, fan_out), jnp.float32, -bound, bound)
    return params


def reference_forward_bf16(x, p):
    """Pure-JAX reference mimicking the kernel's bf16 storage / activation casts."""
    bf = lambda a: a.astype(jnp.bfloat16).astype(jnp.float32)
    h1 = jnp.maximum(bf(x) @ bf(p["w1"]) + p["b1"], 0.0)
    h2 = jnp.maximum(bf(h1) @ bf(p["w2"]) + p["b2"], 0.0)
    logits = bf(h2) @ bf(p["w3"]) + p["b3"]
    return jax.nn.softmax(logits, axis=1)


if __name__ == "__main__":
    # Iris features (SepalLength, SepalWidth, PetalLength, PetalWidth) -> 4
    INPUT_SIZE = 4
    BATCH = 8

    key = jax.random.PRNGKey(0)
    key, kx, kx2 = jax.random.split(key, 3)
    x = jax.random.normal(kx, (BATCH, INPUT_SIZE), jnp.float32)
    params = init_params(key, INPUT_SIZE)

    # Small-batch path (single grid step).
    out = jax.block_until_ready(simple_nn_forward(x, params))
    ref = reference_forward_bf16(x, params)
    assert out.shape == (BATCH, N_CLASSES)
    # Tolerance covers bf16 activation/weight rounding + EUP approx reciprocal.
    assert jnp.allclose(out, ref, atol=5e-3, rtol=5e-3)
    assert jnp.allclose(jnp.sum(out, axis=1), 1.0, atol=5e-3)

    # Multi-tile path: ragged batch, grid rounded to an even length (>= 2)
    # so v7x megacore sharding is balanced.
    B2 = 300
    x2 = jax.random.normal(kx2, (B2, INPUT_SIZE), jnp.float32)
    out2 = jax.block_until_ready(simple_nn_forward(x2, params, block_b=128))
    ref2 = reference_forward_bf16(x2, params)
    assert out2.shape == (B2, N_CLASSES)
    assert jnp.allclose(out2, ref2, atol=5e-3, rtol=5e-3)
    assert jnp.allclose(jnp.sum(out2, axis=1), 1.0, atol=5e-3)

    print("KERNEL_OK")
</pallas_src>

<mosaic_0001>
module attributes {stable_mosaic.version = 11 : i64} {
  func.func @simple_nn_kernel(%arg0: i32, %arg1: memref<16x4xbf16, #tpu.memory_space<vmem>>, %arg2: memref<4x36xbf16, #tpu.memory_space<vmem>>, %arg3: memref<1x36xf32, #tpu.memory_space<vmem>>, %arg4: memref<36x24xbf16, #tpu.memory_space<vmem>>, %arg5: memref<1x24xf32, #tpu.memory_space<vmem>>, %arg6: memref<24x8xbf16, #tpu.memory_space<vmem>>, %arg7: memref<1x8xf32, #tpu.memory_space<vmem>>, %arg8: memref<16x8xf32, #tpu.memory_space<vmem>>) attributes {dimension_semantics = [#tpu.dimension_semantics<parallel>], iteration_bounds = array<i64: 1>, scalar_prefetch = 0 : i64, scratch_operands = 0 : i64, tpu.core_type = #tpu.core_type<tc>, window_params = [{transform_indices = @transform_0, window_bounds = array<i64: 16, 4>}, {pipeline_mode = #tpu.pipeline_mode<synchronous>, transform_indices = @transform_1, window_bounds = array<i64: 4, 36>}, {pipeline_mode = #tpu.pipeline_mode<synchronous>, transform_indices = @transform_2, window_bounds = array<i64: 1, 36>}, {pipeline_mode = #tpu.pipeline_mode<synchronous>, transform_indices = @transform_3, window_bounds = array<i64: 36, 24>}, {pipeline_mode = #tpu.pipeline_mode<synchronous>, transform_indices = @transform_4, window_bounds = array<i64: 1, 24>}, {pipeline_mode = #tpu.pipeline_mode<synchronous>, transform_indices = @transform_5, window_bounds = array<i64: 24, 8>}, {pipeline_mode = #tpu.pipeline_mode<synchronous>, transform_indices = @transform_6, window_bounds = array<i64: 1, 8>}, {transform_indices = @transform_7, window_bounds = array<i64: 16, 8>}]} {
    %c0 = arith.constant 0 : index
    %c0_0 = arith.constant 0 : index
    %0 = vector.load %arg1[%c0, %c0_0] : memref<16x4xbf16, #tpu.memory_space<vmem>>, vector<16x4xbf16>
    %c0_1 = arith.constant 0 : index
    %c0_2 = arith.constant 0 : index
    %1 = vector.load %arg2[%c0_1, %c0_2] : memref<4x36xbf16, #tpu.memory_space<vmem>>, vector<4x36xbf16>
    %cst = arith.constant dense<0.000000e+00> : vector<16x36xf32>
    %2 = tpu.matmul %0, %1, %cst {dimension_numbers = #tpu.dot_dimension_numbers<[1], [0], [0], [1], [0, 0, 1, 1], [], []>} : vector<16x4xbf16>, vector<4x36xbf16>, vector<16x36xf32> -> vector<16x36xf32>
    %c0_3 = arith.constant 0 : index
    %c0_4 = arith.constant 0 : index
    %3 = vector.load %arg3[%c0_3, %c0_4] : memref<1x36xf32, #tpu.memory_space<vmem>>, vector<1x36xf32>
    %4 = vector.broadcast %3 : vector<1x36xf32> to vector<16x36xf32>
    %5 = arith.addf %2, %4 : vector<16x36xf32>
    %cst_5 = arith.constant 0.000000e+00 : f32
    %6 = vector.broadcast %cst_5 : f32 to vector<16x36xf32>
    %7 = arith.maximumf %5, %6 : vector<16x36xf32>
    %8 = arith.truncf %7 : vector<16x36xf32> to vector<16x36xbf16>
    %c0_6 = arith.constant 0 : index
    %c0_7 = arith.constant 0 : index
    %9 = vector.load %arg4[%c0_6, %c0_7] : memref<36x24xbf16, #tpu.memory_space<vmem>>, vector<36x24xbf16>
    %cst_8 = arith.constant dense<0.000000e+00> : vector<16x24xf32>
    %10 = tpu.matmul %8, %9, %cst_8 {dimension_numbers = #tpu.dot_dimension_numbers<[1], [0], [0], [1], [0, 0, 1, 1], [], []>} : vector<16x36xbf16>, vector<36x24xbf16>, vector<16x24xf32> -> vector<16x24xf32>
    %c0_9 = arith.constant 0 : index
    %c0_10 = arith.constant 0 : index
    %11 = vector.load %arg5[%c0_9, %c0_10] : memref<1x24xf32, #tpu.memory_space<vmem>>, vector<1x24xf32>
    %12 = vector.broadcast %11 : vector<1x24xf32> to vector<16x24xf32>
    %13 = arith.addf %10, %12 : vector<16x24xf32>
    %cst_11 = arith.constant 0.000000e+00 : f32
    %14 = vector.broadcast %cst_11 : f32 to vector<16x24xf32>
    %15 = arith.maximumf %13, %14 : vector<16x24xf32>
    %16 = arith.truncf %15 : vector<16x24xf32> to vector<16x24xbf16>
    %c0_12 = arith.constant 0 : index
    %c0_13 = arith.constant 0 : index
    %17 = vector.load %arg6[%c0_12, %c0_13] : memref<24x8xbf16, #tpu.memory_space<vmem>>, vector<24x8xbf16>
    %cst_14 = arith.constant dense<0.000000e+00> : vector<16x8xf32>
    %18 = tpu.matmul %16, %17, %cst_14 {dimension_numbers = #tpu.dot_dimension_numbers<[1], [0], [0], [1], [0, 0, 1, 1], [], []>} : vector<16x24xbf16>, vector<24x8xbf16>, vector<16x8xf32> -> vector<16x8xf32>
    %c0_15 = arith.constant 0 : index
    %c0_16 = arith.constant 0 : index
    %19 = vector.load %arg7[%c0_15, %c0_16] : memref<1x8xf32, #tpu.memory_space<vmem>>, vector<1x8xf32>
    %20 = vector.broadcast %19 : vector<1x8xf32> to vector<16x8xf32>
    %21 = arith.addf %18, %20 : vector<16x8xf32>
    %cst_17 = arith.constant dense<0xFF800000> : vector<16xf32>
    %22 = vector.multi_reduction <maximumf>, %21, %cst_17 [1] : vector<16x8xf32> to vector<16xf32>
    %23 = vector.shape_cast %22 : vector<16xf32> to vector<16x1xf32>
    %24 = vector.broadcast %23 : vector<16x1xf32> to vector<16x8xf32>
    %25 = arith.subf %21, %24 : vector<16x8xf32>
    %26 = math.exp %25 : vector<16x8xf32>
    %cst_18 = arith.constant dense<0.000000e+00> : vector<16xf32>
    %27 = vector.multi_reduction <add>, %26, %cst_18 [1] : vector<16x8xf32> to vector<16xf32>
    %28 = vector.shape_cast %27 : vector<16xf32> to vector<16x1xf32>
    %29 = tpu.reciprocal %28 {approx = true} : vector<16x1xf32> -> vector<16x1xf32>
    %30 = vector.broadcast %29 : vector<16x1xf32> to vector<16x8xf32>
    %31 = arith.mulf %26, %30 : vector<16x8xf32>
    %c0_19 = arith.constant 0 : index
    %c0_20 = arith.constant 0 : index
    %32 = vector.load %arg8[%c0_19, %c0_20] : memref<16x8xf32, #tpu.memory_space<vmem>>, vector<16x8xf32>
    tpu.vector_store %arg8[%c0_19, %c0_20], %31 {strides = array<i32>} : memref<16x8xf32, #tpu.memory_space<vmem>>, vector<16x8xf32>,
    return
  }
  func.func @transform_0(%arg0: i32) -> (i32, i32) {
    %c0_i32 = arith.constant 0 : i32
    %c0_i32_0 = arith.constant 0 : i32
    return %arg0, %c0_i32 : i32, i32
  }
  func.func @transform_1(%arg0: i32) -> (i32, i32) {
    %c0_i32 = arith.constant 0 : i32
    %c0_i32_0 = arith.constant 0 : i32
    %c0_i32_1 = arith.constant 0 : i32
    return %c0_i32, %c0_i32_0 : i32, i32
  }
  func.func @transform_2(%arg0: i32) -> (i32, i32) {
    %c0_i32 = arith.constant 0 : i32
    %c0_i32_0 = arith.constant 0 : i32
    %c0_i32_1 = arith.constant 0 : i32
    return %c0_i32, %c0_i32_0 : i32, i32
  }
  func.func @transform_3(%arg0: i32) -> (i32, i32) {
    %c0_i32 = arith.constant 0 : i32
    %c0_i32_0 = arith.constant 0 : i32
    %c0_i32_1 = arith.constant 0 : i32
    return %c0_i32, %c0_i32_0 : i32, i32
  }
  func.func @transform_4(%arg0: i32) -> (i32, i32) {
    %c0_i32 = arith.constant 0 : i32
    %c0_i32_0 = arith.constant 0 : i32
    %c0_i32_1 = arith.constant 0 : i32
    return %c0_i32, %c0_i32_0 : i32, i32
  }
  func.func @transform_5(%arg0: i32) -> (i32, i32) {
    %c0_i32 = arith.constant 0 : i32
    %c0_i32_0 = arith.constant 0 : i32
    %c0_i32_1 = arith.constant 0 : i32
    return %c0_i32, %c0_i32_0 : i32, i32
  }
  func.func @transform_6(%arg0: i32) -> (i32, i32) {
    %c0_i32 = arith.constant 0 : i32
    %c0_i32_0 = arith.constant 0 : i32
    %c0_i32_1 = arith.constant 0 : i32
    return %c0_i32, %c0_i32_0 : i32, i32
  }
  func.func @transform_7(%arg0: i32) -> (i32, i32) {
    %c0_i32 = arith.constant 0 : i32
    %c0_i32_0 = arith.constant 0 : i32
    return %arg0, %c0_i32 : i32, i32
  }
}

</mosaic_0001>

<llo_original>
// kernel: tpu_custom_call.1
$region0: #{tpu_custom_call.1}
  #allocation0 [shape = 'u32[]', space=smem, size = 0x4, offset = 0x4, fixed_abs, tag = 'smem constant byte address 0x4 - core index']
  #allocation1 [shape = 'u32[144,128]{1,0:T(1,128)}', space=vmem, size = 0x12000, scoped, tag = 'internal scratch']
  %s0 = inlined_call_operand.vmem [shape: bf16[16,4], index: 0, kind: input, shape index: {}]
  %s1 = inlined_call_operand.vmem [shape: bf16[4,36], index: 1, kind: input, shape index: {}]
  %s2 = inlined_call_operand.vmem [shape: f32[1,36], index: 2, kind: input, shape index: {}]
  %s3 = inlined_call_operand.vmem [shape: bf16[36,24], index: 3, kind: input, shape index: {}]
  %s4 = inlined_call_operand.vmem [shape: f32[1,24], index: 4, kind: input, shape index: {}]
  %s5 = inlined_call_operand.vmem [shape: bf16[24,8], index: 5, kind: input, shape index: {}]
  %s6 = inlined_call_operand.vmem [shape: f32[1,8], index: 6, kind: input, shape index: {}]
  %s7 = inlined_call_operand.vmem [shape: f32[16,8], index: 7, kind: output, shape index: {}]
  %s8 = sld [smem:[#allocation0]]
  $region38: #{tpu_custom_call.1} parent=0
    _
  %s10 = ssub.s32 1, %s8
  %s11 = scalar_select 0, %s10, %s8
  // Predicated region
  $region2: #{tpu_custom_call.1} parent=0 // pred_check
    _
  $region3: #{tpu_custom_call.1} parent=0 // pred_check_branch
    %13 = sbr.rel (0) target = $region5
  $region4: #{tpu_custom_call.1} parent=0 // pred_region
    _
  $region5: #{tpu_custom_call.1} parent=0 // pred_fallthru
    _
  // Predicated region
  $region6: #{tpu_custom_call.1} parent=0 // pred_check
    _
  $region7: #{tpu_custom_call.1} parent=0 // pred_check_branch
    %15 = sbr.rel (0) target = $region9
  $region8: #{tpu_custom_call.1} parent=0 // pred_region
    _
  $region9: #{tpu_custom_call.1} parent=0 // pred_fallthru
    _
  // Predicated region
  $region10: #{tpu_custom_call.1} parent=0 // pred_check
    _
  $region11: #{tpu_custom_call.1} parent=0 // pred_check_branch
    %17 = sbr.rel (0) target = $region13
  $region12: #{tpu_custom_call.1} parent=0 // pred_region
    _
  $region13: #{tpu_custom_call.1} parent=0 // pred_fallthru
    _
  // Predicated region
  $region14: #{tpu_custom_call.1} parent=0 // pred_check
    _
  $region15: #{tpu_custom_call.1} parent=0 // pred_check_branch
    %19 = sbr.rel (0) target = $region17
  $region16: #{tpu_custom_call.1} parent=0 // pred_region
    _
  $region17: #{tpu_custom_call.1} parent=0 // pred_fallthru
    _
  // Predicated region
  $region18: #{tpu_custom_call.1} parent=0 // pred_check
    _
  $region19: #{tpu_custom_call.1} parent=0 // pred_check_branch
    %21 = sbr.rel (0) target = $region21
  $region20: #{tpu_custom_call.1} parent=0 // pred_region
    _
  $region21: #{tpu_custom_call.1} parent=0 // pred_fallthru
    _
  // Predicated region
  $region22: #{tpu_custom_call.1} parent=0 // pred_check
    _
  $region23: #{tpu_custom_call.1} parent=0 // pred_check_branch
    %23 = sbr.rel (0) target = $region25
  $region24: #{tpu_custom_call.1} parent=0 // pred_region
    _
  $region25: #{tpu_custom_call.1} parent=0 // pred_fallthru
    _
  // Predicated region
  $region26: #{tpu_custom_call.1} parent=0 // pred_check
    _
  $region27: #{tpu_custom_call.1} parent=0 // pred_check_branch
    %25 = sbr.rel (0) target = $region29
  $region28: #{tpu_custom_call.1} parent=0 // pred_region
    _
  $region29: #{tpu_custom_call.1} parent=0 // pred_fallthru
    _
  %v27 = vld [vmem:[%s0] sm:$0xf]
  %v28 = vld [vmem:[%s0 + $0x4] sm:$0xf]
  %v29 = vld [vmem:[%s1] sm:$0x3]
  %v30 = vld [vmem:[%s2] sm:$0x1]
  %v32 = vlaneseq
  %v33 = vshrl.u32 %v32, 7
  %v34 = vsub.s32 0, %v33
  %v35 = vrot.slane %v30, %v34
  %v39 = vunpack.c.l.b16 %v27
  %v40 = vunpack.c.l.b16 %v28
  %v41 = vpack.c.b16 %v40, %v39
  %vm42 = vcmask 31744
  %v44 = vsel %vm42, %v41, 0
  %vm46 = vcmask 1041408
  %v48 = vsel %vm46, %v29, 0
  %50 = vmatprep.subr.bf16.mxu0 0
  %51 = vmatpush1.bf16.msra.mxu0 %v48
  %52 = vmatprep.subr.bf16.mxu0 0
  %53 = vmatpush1.bf16.msra.mxu0 0
  %54 = vmatprep.subr.bf16.mxu0 0
  %55 = vmatpush1.bf16.msra.mxu0 0
  %56 = vmatprep.subr.bf16.mxu0 0
  %57 = vmatpush1.bf16.msra.mxu0 0
  %58 = vmatprep.subr.bf16.mxu0 0
  %59 = vmatpush1.bf16.msra.mxu0 0
  %60 = vmatprep.subr.bf16.mxu0 0
  %61 = vmatpush1.bf16.msra.mxu0 0
  %62 = vmatprep.subr.bf16.mxu0 0
  %63 = vmatpush1.bf16.msra.mxu0 0
  %64 = vmatprep.subr.bf16.mxu0 0
  %65 = vmatpush1.bf16.msra.mxu0 0
  %66 = vmatprep.subr.bf16.mxu0 0
  %67 = vmatpush1.bf16.msra.mxu0 0
  %68 = vmatprep.subr.bf16.mxu0 0
  %69 = vmatpush1.bf16.msra.mxu0 0
  %70 = vmatprep.subr.bf16.mxu0 0
  %71 = vmatpush1.bf16.msra.mxu0 0
  %72 = vmatprep.subr.bf16.mxu0 0
  %73 = vmatpush1.bf16.msra.mxu0 0
  %74 = vmatprep.subr.bf16.mxu0 0
  %75 = vmatpush1.bf16.msra.mxu0 0
  %76 = vmatprep.subr.bf16.mxu0 0
  %77 = vmatpush1.bf16.msra.mxu0 0
  %78 = vmatprep.subr.bf16.mxu0 0
  %79 = vmatpush1.bf16.msra.mxu0 0
  %80 = vmatprep.subr.bf16.mxu0 0
  %81 = vmatpush1.bf16.msra.mxu0 0
  %82 = vmatprep.mubr.bf16.mxu0 0
  %83 = vmatmul.mubr.bf16.gmra.mrb[0].mxu0 %v44
  %v84 = vpop.f32.mrb[0].mxu0
  %v85 = vadd.f32 %v35, %v84
  %v86 = vpop.f32.mrb[0].mxu0
  %v87 = vpop.f32.mrb[0].mxu0
  %v88 = vadd.f32 %v35, %v87
  %v89 = vpop.f32.mrb[0].mxu0
  %90 = vdwg.mxu0
  %v91 = vmax.f32 %v85, 0.0
  %v92 = vmax.f32 %v88, 0.0
  %v93 = vpack.c.bf16 %v92, %v91
  %v94 = vld [vmem:[%s3] sm:$0xf]
  %v95 = vld [vmem:[%s3 + $0x4] sm:$0xf]
  %v96 = vld [vmem:[%s3 + $0x8] sm:$0xf]
  %v97 = vld [vmem:[%s3 + $0xc] sm:$0xf]
  %v98 = vld [vmem:[%s3 + $0x10] sm:$0x3]
  %v99 = vld [vmem:[%s4] sm:$0x1]
  %v101 = vlaneseq
  %v102 = vshrl.u32 %v101, 7
  %v103 = vsub.s32 0, %v102
  %v104 = vrot.slane %v99, %v103
  %v111 = vunpack.c.l.b16 %v94
  %v112 = vunpack.c.l.b16 %v95
  %v113 = vunpack.c.l.b16 %v96
  %v114 = vunpack.c.l.b16 %v97
  %v115 = vunpack.c.l.b16 %v98
  %v116 = vpack.c.b16 %v112, %v111
  %v117 = vpack.c.b16 %v114, %v113
  %v118 = vpack.c.b16 %v115, %v115
  %vm121 = vcmask 293888
  %v123 = vsel %vm121, %v93, 0
  %v126 = vsel %vm46, %v118, 0
  %128 = vmatprep.subr.bf16.mxu0 0
  %129 = vmatpush1.bf16.msra.mxu0 %v116
  %130 = vmatprep.subr.bf16.mxu0 0
  %131 = vmatpush1.bf16.msra.mxu0 %v117
  %132 = vmatprep.subr.bf16.mxu0 0
  %133 = vmatpush1.bf16.msra.mxu0 %v126
  %134 = vmatprep.subr.bf16.mxu0 0
  %135 = vmatpush1.bf16.msra.mxu0 0
  %136 = vmatprep.subr.bf16.mxu0 0
  %137 = vmatpush1.bf16.msra.mxu0 0
  %138 = vmatprep.subr.bf16.mxu0 0
  %139 = vmatpush1.bf16.msra.mxu0 0
  %140 = vmatprep.subr.bf16.mxu0 0
  %141 = vmatpush1.bf16.msra.mxu0 0
  %142 = vmatprep.subr.bf16.mxu0 0
  %143 = vmatpush1.bf16.msra.mxu0 0
  %144 = vmatprep.subr.bf16.mxu0 0
  %145 = vmatpush1.bf16.msra.mxu0 0
  %146 = vmatprep.subr.bf16.mxu0 0
  %147 = vmatpush1.bf16.msra.mxu0 0
  %148 = vmatprep.subr.bf16.mxu0 0
  %149 = vmatpush1.bf16.msra.mxu0 0
  %150 = vmatprep.subr.bf16.mxu0 0
  %151 = vmatpush1.bf16.msra.mxu0 0
  %152 = vmatprep.subr.bf16.mxu0 0
  %153 = vmatpush1.bf16.msra.mxu0 0
  %154 = vmatprep.subr.bf16.mxu0 0
  %155 = vmatpush1.bf16.msra.mxu0 0
  %156 = vmatprep.subr.bf16.mxu0 0
  %157 = vmatpush1.bf16.msra.mxu0 0
  %158 = vmatprep.subr.bf16.mxu0 0
  %159 = vmatpush1.bf16.msra.mxu0 0
  %160 = vmatprep.mubr.bf16.mxu0 0
  %161 = vmatmul.mubr.bf16.gmra.mrb[0].mxu0 %v123
  %v162 = vpop.f32.mrb[0].mxu0
  %v163 = vadd.f32 %v104, %v162
  %v164 = vpop.f32.mrb[0].mxu0
  %v165 = vpop.f32.mrb[0].mxu0
  %v166 = vadd.f32 %v104, %v165
  %v167 = vpop.f32.mrb[0].mxu0
  %168 = vdwg.mxu0
  %v169 = vmax.f32 %v163, 0.0
  %v170 = vmax.f32 %v166, 0.0
  %v171 = vpack.c.bf16 %v170, %v169
  %v172 = vld [vmem:[%s5] sm:$0xf]
  %v173 = vld [vmem:[%s5 + $0x4] sm:$0xf]
  %v174 = vld [vmem:[%s5 + $0x8] sm:$0xf]
  %v175 = vld [vmem:[%s6] sm:$0x1]
  %v177 = vlaneseq
  %v178 = vshrl.u32 %v177, 7
  %v179 = vsub.s32 0, %v178
  %v180 = vrot.slane %v175, %v179
  %v185 = vunpack.c.l.b16 %v172
  %v186 = vunpack.c.l.b16 %v173
  %v187 = vunpack.c.l.b16 %v174
  %v188 = vpack.c.b16 %v186, %v185
  %v189 = vpack.c.b16 %v187, %v187
  %vm191 = vcmask 195584
  %v193 = vsel %vm191, %v171, 0
  %vm195 = vcmask 1043456
  %v197 = vsel %vm195, %v189, 0
  %199 = vmatprep.subr.bf16.mxu0 0
  %200 = vmatpush1.bf16.msra.mxu0 %v188
  %201 = vmatprep.subr.bf16.mxu0 0
  %202 = vmatpush1.bf16.msra.mxu0 %v197
  %203 = vmatprep.subr.bf16.mxu0 0
  %204 = vmatpush1.bf16.msra.mxu0 0
  %205 = vmatprep.subr.bf16.mxu0 0
  %206 = vmatpush1.bf16.msra.mxu0 0
  %207 = vmatprep.subr.bf16.mxu0 0
  %208 = vmatpush1.bf16.msra.mxu0 0
  %209 = vmatprep.subr.bf16.mxu0 0
  %210 = vmatpush1.bf16.msra.mxu0 0
  %211 = vmatprep.subr.bf16.mxu0 0
  %212 = vmatpush1.bf16.msra.mxu0 0
  %213 = vmatprep.subr.bf16.mxu0 0
  %214 = vmatpush1.bf16.msra.mxu0 0
  %215 = vmatprep.subr.bf16.mxu0 0
  %216 = vmatpush1.bf16.msra.mxu0 0
  %217 = vmatprep.subr.bf16.mxu0 0
  %218 = vmatpush1.bf16.msra.mxu0 0
  %219 = vmatprep.subr.bf16.mxu0 0
  %220 = vmatpush1.bf16.msra.mxu0 0
  %221 = vmatprep.subr.bf16.mxu0 0
  %222 = vmatpush1.bf16.msra.mxu0 0
  %223 = vmatprep.subr.bf16.mxu0 0
  %224 = vmatpush1.bf16.msra.mxu0 0
  %225 = vmatprep.subr.bf16.mxu0 0
  %226 = vmatpush1.bf16.msra.mxu0 0
  %227 = vmatprep.subr.bf16.mxu0 0
  %228 = vmatpush1.bf16.msra.mxu0 0
  %229 = vmatprep.subr.bf16.mxu0 0
  %230 = vmatpush1.bf16.msra.mxu0 0
  %231 = vmatprep.mubr.bf16.mxu0 0
  %232 = vmatmul.mubr.bf16.gmra.mrb[0].mxu0 %v193
  %v233 = vpop.f32.mrb[0].mxu0
  %v234 = vadd.f32 %v180, %v233
  %v235 = vpop.f32.mrb[0].mxu0
  %v236 = vpop.f32.mrb[0].mxu0
  %v237 = vadd.f32 %v180, %v236
  %v238 = vpop.f32.mrb[0].mxu0
  %239 = vdwg.mxu0
  %vm240 = vcmask 64512
  %v241 = vsel %vm240, %v234, -inf
  %242 = vmax.xlane.f32.xlu0 %v241
  %v243 = vpop.xlane.xlu0 %242
  %v244 = vsel %vm240, %v237, -inf
  %245 = vmax.xlane.f32.xlu0 %v244
  %v246 = vpop.xlane.xlu0 %245
  %v247 = vsub.f32 %v234, %v243
  %v248 = vsub.f32 %v237, %v246
  %v249 = vmul.f32 %v247, 1.442695
  %v250 = vpow.pop %v249
  %v251 = vmul.f32 %v248, 1.442695
  %v252 = vpow.pop %v251
  %v253 = vsel %vm240, %v250, 0.0
  %254 = vadd.xlane.f32.xlu0 %v253
  %v255 = vpop.xlane.xlu0 %254
  %v256 = vsel %vm240, %v252, 0.0
  %257 = vadd.xlane.f32.xlu0 %v256
  %v258 = vpop.xlane.xlu0 %257
  %v259 = vrcp.pop %v255
  %v260 = vrcp.pop %v258
  %v261 = vmul.f32 %v250, %v259
  %v262 = vmul.f32 %v252, %v260
  %263 = vst.msk [vmem:[%s7] sm:$0xff] %vm240, %v261
  %264 = vst.msk [vmem:[%s7 + $0x8] sm:$0xff] %vm240, %v262
  // Predicated region
  $region30: #{tpu_custom_call.1} parent=0 // pred_check
    _
  $region31: #{tpu_custom_call.1} parent=0 // pred_check_branch
    %266 = sbr.rel (0) target = $region33
  $region32: #{tpu_custom_call.1} parent=0 // pred_region
    _
  $region33: #{tpu_custom_call.1} parent=0 // pred_fallthru
    _
  // Predicated region
  $region34: #{tpu_custom_call.1} parent=0 // pred_check
    _
  $region35: #{tpu_custom_call.1} parent=0 // pred_check_branch
    %268 = sbr.rel (0) target = $region37
  $region36: #{tpu_custom_call.1} parent=0 // pred_region
    _
  $region37: #{tpu_custom_call.1} parent=0 // pred_fallthru
    _

</llo_original>
